<compile_context>
chip_gen: v6e
topology: v6e:2x2x1
jax: 0.10.0
libtpu: 0.0.40
codegen_flags: <defaults>
</compile_context>

<pallas_src>
import jax
import jax.numpy as jnp
from jax import lax
from jax.experimental import pallas as pl
from jax.experimental.pallas import tpu as pltpu


def _nsp_head_kernel(x_ref, w_ref, b_ref, o_ref):
    # x_ref: [TB, H] (VMEM)   w_ref: [2, H] (VMEM, PyTorch layout, lane-dense)
    # b_ref: [2]     (SMEM)   o_ref: [TB, 2] (VMEM)
    x = x_ref[...]
    w = w_ref[...]
    # scores = x @ w.T  (contract over H, no materialized transpose)
    scores = lax.dot_general(
        x, w,
        dimension_numbers=(((1,), (1,)), ((), ())),
        preferred_element_type=jnp.float32,
    )
    # Broadcast the two SMEM bias scalars across the [TB, 2] result.
    col = lax.broadcasted_iota(jnp.int32, scores.shape, 1)
    bias = jnp.where(col == 0, b_ref[0], b_ref[1])
    o_ref[...] = (scores + bias).astype(o_ref.dtype)


def bert_only_nsp_head(pooled_output, weight, bias, *, block_b=512):
    """seq_relationship_score = pooled_output @ weight.T + bias

    pooled_output: [B, H]
    weight:        [2, H]  (PyTorch nn.Linear convention, kept untransposed)
    bias:          [2]
    returns:       [B, 2]
    """
    B, H = pooled_output.shape
    assert weight.shape == (2, H)
    assert bias.shape == (2,)

    # Batch tile: whole batch if small, otherwise a 512-row tile (multiple of 8,
    # ~2 MiB/block at H=1024 f32 — safe even with double buffering on v7x).
    TB = B if B <= block_b else block_b
    grid = (pl.cdiv(B, TB),)

    x_bytes = pooled_output.dtype.itemsize
    cost = pl.CostEstimate(
        flops=2 * B * H * 2,
        transcendentals=0,
        bytes_accessed=(B * H * x_bytes
                        + 2 * H * weight.dtype.itemsize
                        + 2 * bias.dtype.itemsize
                        + B * 2 * x_bytes),
    )

    return pl.pallas_call(
        _nsp_head_kernel,
        out_shape=jax.ShapeDtypeStruct((B, 2), pooled_output.dtype),
        grid=grid,
        in_specs=[
            pl.BlockSpec((TB, H), lambda i: (i, 0)),            # batch-tiled activations
            pl.BlockSpec((2, H), lambda i: (0, 0)),             # replicated weight, lane-dense
            pl.BlockSpec(memory_space=pltpu.MemorySpace.SMEM),  # 8-byte bias in SMEM
        ],
        out_specs=pl.BlockSpec((TB, 2), lambda i: (i, 0)),
        compiler_params=pltpu.CompilerParams(
            dimension_semantics=("parallel",),
        ),
        cost_estimate=cost,
    )(pooled_output, weight, bias)


if __name__ == "__main__":
    key = jax.random.PRNGKey(0)
    k_x, k_w, k_b = jax.random.split(key, 3)

    # Small shapes consistent with the module (batch, hidden_size).
    batch = 8
    hidden = 32

    pooled_output = jax.random.normal(k_x, (batch, hidden), dtype=jnp.float32)
    # nn.Linear(hidden_size, 2): weight [2, hidden], bias [2]
    weight = jax.random.normal(k_w, (2, hidden), dtype=jnp.float32) * 0.02
    bias = jax.random.normal(k_b, (2,), dtype=jnp.float32) * 0.02

    scores = bert_only_nsp_head(pooled_output, weight, bias)
    scores = jax.block_until_ready(scores)

    ref = pooled_output @ weight.T + bias
    assert scores.shape == (batch, 2)
    assert jnp.allclose(scores, ref, atol=1e-5, rtol=1e-5)

    # Second check: exercises the multi-tile (pipelined, parallel) grid path.
    B2, H2, TB2 = 512, 128, 256
    k_x2, k_w2, k_b2 = jax.random.split(jax.random.PRNGKey(1), 3)
    x2 = jax.random.normal(k_x2, (B2, H2), dtype=jnp.float32)
    w2 = jax.random.normal(k_w2, (2, H2), dtype=jnp.float32) * 0.02
    b2 = jax.random.normal(k_b2, (2,), dtype=jnp.float32) * 0.02
    out2 = jax.block_until_ready(bert_only_nsp_head(x2, w2, b2, block_b=TB2))
    ref2 = x2 @ w2.T + b2
    assert jnp.allclose(out2, ref2, atol=1e-4, rtol=1e-4)

    print("KERNEL_OK")
</pallas_src>

<mosaic_0001>
module attributes {stable_mosaic.version = 11 : i64} {
  func.func @_nsp_head_kernel(%arg0: i32, %arg1: memref<8x32xf32, #tpu.memory_space<vmem>>, %arg2: memref<2x32xf32, #tpu.memory_space<vmem>>, %arg3: memref<2xf32, #tpu.memory_space<smem>>, %arg4: memref<8x2xf32, #tpu.memory_space<vmem>>) attributes {dimension_semantics = [#tpu.dimension_semantics<parallel>], iteration_bounds = array<i64: 1>, scalar_prefetch = 0 : i64, scratch_operands = 0 : i64, tpu.core_type = #tpu.core_type<tc>, window_params = [{transform_indices = @transform_0, window_bounds = array<i64: 8, 32>}, {pipeline_mode = #tpu.pipeline_mode<synchronous>, transform_indices = @transform_1, window_bounds = array<i64: 2, 32>}, {transform_indices = @transform_2, window_bounds = array<i64: 2>}, {transform_indices = @transform_3, window_bounds = array<i64: 8, 2>}]} {
    %c0 = arith.constant 0 : index
    %c0_0 = arith.constant 0 : index
    %0 = vector.load %arg1[%c0, %c0_0] : memref<8x32xf32, #tpu.memory_space<vmem>>, vector<8x32xf32>
    %c0_1 = arith.constant 0 : index
    %c0_2 = arith.constant 0 : index
    %1 = vector.load %arg2[%c0_1, %c0_2] : memref<2x32xf32, #tpu.memory_space<vmem>>, vector<2x32xf32>
    %cst = arith.constant dense<0.000000e+00> : vector<8x2xf32>
    %2 = tpu.matmul %0, %1, %cst {dimension_numbers = #tpu.dot_dimension_numbers<[1], [1], [0], [0], [0, 0, 1, 0], [], []>} : vector<8x32xf32>, vector<2x32xf32>, vector<8x2xf32> -> vector<8x2xf32>
    %3 = tpu.iota {dimensions = array<i32: 1>} : vector<8x2xi32>
    %c0_i32 = arith.constant 0 : i32
    %4 = vector.broadcast %c0_i32 : i32 to vector<8x2xi32>
    %5 = arith.cmpi eq, %3, %4 : vector<8x2xi32>
    %c0_3 = arith.constant 0 : index
    %6 = memref.load %arg3[%c0_3] : memref<2xf32, #tpu.memory_space<smem>>
    %c1 = arith.constant 1 : index
    %7 = memref.load %arg3[%c1] : memref<2xf32, #tpu.memory_space<smem>>
    %8 = vector.broadcast %6 : f32 to vector<8x2xf32>
    %9 = vector.broadcast %7 : f32 to vector<8x2xf32>
    %10 = arith.select %5, %8, %9 : vector<8x2xi1>, vector<8x2xf32>
    %11 = arith.addf %2, %10 : vector<8x2xf32>
    %c0_4 = arith.constant 0 : index
    %c0_5 = arith.constant 0 : index
    %12 = vector.load %arg4[%c0_4, %c0_5] : memref<8x2xf32, #tpu.memory_space<vmem>>, vector<8x2xf32>
    tpu.vector_store %arg4[%c0_4, %c0_5], %11 {strides = array<i32>} : memref<8x2xf32, #tpu.memory_space<vmem>>, vector<8x2xf32>,
    return
  }
  func.func @transform_0(%arg0: i32) -> (i32, i32) {
    %c0_i32 = arith.constant 0 : i32
    %c0_i32_0 = arith.constant 0 : i32
    return %arg0, %c0_i32 : i32, i32
  }
  func.func @transform_1(%arg0: i32) -> (i32, i32) {
    %c0_i32 = arith.constant 0 : i32
    %c0_i32_0 = arith.constant 0 : i32
    %c0_i32_1 = arith.constant 0 : i32
    return %c0_i32, %c0_i32_0 : i32, i32
  }
  func.func @transform_2(%arg0: i32) -> i32 {
    %c0_i32 = arith.constant 0 : i32
    %c0_i32_0 = arith.constant 0 : i32
    return %c0_i32 : i32
  }
  func.func @transform_3(%arg0: i32) -> (i32, i32) {
    %c0_i32 = arith.constant 0 : i32
    %c0_i32_0 = arith.constant 0 : i32
    return %arg0, %c0_i32 : i32, i32
  }
}

</mosaic_0001>

<llo_original>
// kernel: tpu_custom_call.1
$region0: #{tpu_custom_call.1}
  #allocation0 [shape = 'u32[]', space=smem, size = 0x4, offset = 0x4, fixed_abs, tag = 'smem constant byte address 0x4 - core index']
  #allocation1 [shape = 'u32[144,128]{1,0:T(1,128)}', space=vmem, size = 0x12000, scoped, tag = 'internal scratch']
  %s0 = inlined_call_operand.hbm [shape: f32[8,32], index: 0, kind: input, shape index: {}]
  %s1 = inlined_call_operand.hbm [shape: f32[2,32], index: 1, kind: input, shape index: {}]
  %s2 = inlined_call_operand.vmem [shape: f32[2], index: 2, kind: input, shape index: {}]
  %s3 = inlined_call_operand.vmem [shape: f32[8,2], index: 3, kind: output, shape index: {}]
  %s4 = sld [smem:[#allocation0]]
  $region34: #{tpu_custom_call.1} parent=0
    _
  %s6 = ssub.s32 1, %s4
  %s7 = scalar_select 0, %s6, %s4
  $region1: #{tpu_custom_call.1} parent=0
    #allocation2 [shape = 'u8[4096]{0}', space=vmem, size = 0x1000, scoped, tag = 'input window, operand 0, single buffered']
    #allocation3 [shape = 's32[1]{0}', space=sflag, size = 0x4, scoped, tag = 'scoped memory for tpu_custom_call.1']
    #allocation4 [shape = 's32[1]{0}', space=sflag, size = 0x4, scoped, tag = 'scoped memory for tpu_custom_call.1']
    #allocation5 [shape = 'u8[1024]{0}', space=vmem, size = 0x400, scoped, tag = 'input window, operand 1, single buffered']
    #allocation6 [shape = 's32[1]{0}', space=sflag, size = 0x4, scoped, tag = 'scoped memory for tpu_custom_call.1']
    #allocation7 [shape = 'u8[512]{0}', space=smem, size = 0x200, scoped, tag = 'input window, operand 2, single buffered']
    %8 = vsyncpa [#allocation3], 0
    %9 = vsyncpa [#allocation6], 0
    %10 = vsyncpa [#allocation4], 0
    // Predicated region
    $region2: #{tpu_custom_call.1} parent=1 // pred_check
      _
    $region3: #{tpu_custom_call.1} parent=1 // pred_check_branch
      %12 = sbr.rel (0) target = $region5
    $region4: #{tpu_custom_call.1} parent=1 // pred_region
      %s14 = ssub.s32 128, 128
      %15 = vsyncadd [#allocation3], %s14
      %s17 = sshll.u32 [#allocation2], 4
      %s18 = int_to_ptr.vmem [resolvable:$true] %s17
      %20 = dma.hbm_to_vmem [thread:$0]  %s0, 128, %s18, [#allocation3]
    $region5: #{tpu_custom_call.1} parent=1 // pred_fallthru
      _
    // Predicated region
    $region6: #{tpu_custom_call.1} parent=1 // pred_check
      _
    $region7: #{tpu_custom_call.1} parent=1 // pred_check_branch
      %22 = sbr.rel (0) target = $region9
    $region8: #{tpu_custom_call.1} parent=1 // pred_region
      %s24 = ssub.s32 32, 32
      %25 = vsyncadd [#allocation6], %s24
      %s27 = sshll.u32 [#allocation5], 4
      %s28 = int_to_ptr.vmem [resolvable:$true] %s27
      %30 = dma.hbm_to_vmem [thread:$0]  %s1, 32, %s28, [#allocation6]
    $region9: #{tpu_custom_call.1} parent=1 // pred_fallthru
      _
    // Predicated region
    $region10: #{tpu_custom_call.1} parent=1 // pred_check
      _
    $region11: #{tpu_custom_call.1} parent=1 // pred_check_branch
      %32 = sbr.rel (0) target = $region13
    $region12: #{tpu_custom_call.1} parent=1 // pred_region
      %s34 = ssub.s32 16, 16
      %35 = vsyncadd [#allocation4], %s34
      %s37 = sshll.u32 %s2, 4
      %s38 = int_to_ptr.vmem [resolvable:$true] %s37
      %40 = dma.vmem_to_smem %s38, 16, [#allocation7], [#allocation4]
    $region13: #{tpu_custom_call.1} parent=1 // pred_fallthru
      _
    // Predicated region
    $region14: #{tpu_custom_call.1} parent=1 // pred_check
      _
    $region15: #{tpu_custom_call.1} parent=1 // pred_check_branch
      %42 = sbr.rel (0) target = $region17
    $region16: #{tpu_custom_call.1} parent=1 // pred_region
      %43 = dma.done [#allocation3], 128
    $region17: #{tpu_custom_call.1} parent=1 // pred_fallthru
      _
    // Predicated region
    $region18: #{tpu_custom_call.1} parent=1 // pred_check
      _
    $region19: #{tpu_custom_call.1} parent=1 // pred_check_branch
      %45 = sbr.rel (0) target = $region21
    $region20: #{tpu_custom_call.1} parent=1 // pred_region
      %46 = dma.done [#allocation6], 32
    $region21: #{tpu_custom_call.1} parent=1 // pred_fallthru
      _
    // Predicated region
    $region22: #{tpu_custom_call.1} parent=1 // pred_check
      _
    $region23: #{tpu_custom_call.1} parent=1 // pred_check_branch
      %48 = sbr.rel (0) target = $region25
    $region24: #{tpu_custom_call.1} parent=1 // pred_region
      %49 = dma.done [#allocation4], 16
    $region25: #{tpu_custom_call.1} parent=1 // pred_fallthru
      _
    %50 = sfence
    %v51 = vld [vmem:[#allocation2] sm:$0xff]
    %v52 = vld [vmem:[#allocation5] sm:$0x3]
    %v53 = vlaneseq
    %v54 = vand.u32 %v53, 127
    %vm55 = vcmp.eq.s32.totalorder %v54, 0
    %s56 = sld [smem:[#allocation7]]
    %s57 = sld [smem:[#allocation7 + $0x1]]
    %v58 = vstv %s56
    %v59 = vstv %s57
    %v60 = vsel %vm55, %v58, %v59
    %vm61 = vcmask 261120
    %v63 = vsel %vm61, %v51, 0
    %v66 = vsel %vm61, %v52, 0
    %68 = vmatprep.subr.mxu0 0.0
    %69 = vmatpush1.xpose.msra.mxu0 0.0
    %70 = vmatprep.subr.mxu0 0.0
    %71 = vmatpush1.xpose.msra.mxu0 0.0
    %72 = vmatprep.subr.mxu0 0.0
    %73 = vmatpush1.xpose.msra.mxu0 0.0
    %74 = vmatprep.subr.mxu0 0.0
    %75 = vmatpush1.xpose.msra.mxu0 0.0
    %76 = vmatprep.subr.mxu0 0.0
    %77 = vmatpush1.xpose.msra.mxu0 0.0
    %78 = vmatprep.subr.mxu0 0.0
    %79 = vmatpush1.xpose.msra.mxu0 0.0
    %80 = vmatprep.subr.mxu0 0.0
    %81 = vmatpush1.xpose.msra.mxu0 0.0
    %82 = vmatprep.subr.mxu0 0.0
    %83 = vmatpush1.xpose.msra.mxu0 0.0
    %84 = vmatprep.subr.mxu0 0.0
    %85 = vmatpush1.xpose.msra.mxu0 0.0
    %86 = vmatprep.subr.mxu0 0.0
    %87 = vmatpush1.xpose.msra.mxu0 0.0
    %88 = vmatprep.subr.mxu0 0.0
    %89 = vmatpush1.xpose.msra.mxu0 0.0
    %90 = vmatprep.subr.mxu0 0.0
    %91 = vmatpush1.xpose.msra.mxu0 0.0
    %92 = vmatprep.subr.mxu0 0.0
    %93 = vmatpush1.xpose.msra.mxu0 0.0
    %94 = vmatprep.subr.mxu0 0.0
    %95 = vmatpush1.xpose.msra.mxu0 0.0
    %96 = vmatprep.subr.mxu0 0.0
    %97 = vmatpush1.xpose.msra.mxu0 0.0
    %98 = vmatprep.subr.mxu0 0.0
    %99 = vmatpush1.xpose.msra.mxu0 %v66
    %100 = vmatprep.subr.mxu0 0.0
    %101 = vmatpush2.xpose.msra.mxu0 0.0
    %102 = vmatprep.subr.mxu0 0.0
    %103 = vmatpush2.xpose.msra.mxu0 0.0
    %104 = vmatprep.subr.mxu0 0.0
    %105 = vmatpush2.xpose.msra.mxu0 0.0
    %106 = vmatprep.subr.mxu0 0.0
    %107 = vmatpush2.xpose.msra.mxu0 0.0
    %108 = vmatprep.subr.mxu0 0.0
    %109 = vmatpush2.xpose.msra.mxu0 0.0
    %110 = vmatprep.subr.mxu0 0.0
    %111 = vmatpush2.xpose.msra.mxu0 0.0
    %112 = vmatprep.subr.mxu0 0.0
    %113 = vmatpush2.xpose.msra.mxu0 0.0
    %114 = vmatprep.subr.mxu0 0.0
    %115 = vmatpush2.xpose.msra.mxu0 0.0
    %116 = vmatprep.subr.mxu0 0.0
    %117 = vmatpush2.xpose.msra.mxu0 0.0
    %118 = vmatprep.subr.mxu0 0.0
    %119 = vmatpush2.xpose.msra.mxu0 0.0
    %120 = vmatprep.subr.mxu0 0.0
    %121 = vmatpush2.xpose.msra.mxu0 0.0
    %122 = vmatprep.subr.mxu0 0.0
    %123 = vmatpush2.xpose.msra.mxu0 0.0
    %124 = vmatprep.subr.mxu0 0.0
    %125 = vmatpush2.xpose.msra.mxu0 0.0
    %126 = vmatprep.subr.mxu0 0.0
    %127 = vmatpush2.xpose.msra.mxu0 0.0
    %128 = vmatprep.subr.mxu0 0.0
    %129 = vmatpush2.xpose.msra.mxu0 0.0
    %130 = vmatprep.subr.mxu0 0.0
    %131 = vmatpush2.xpose.msra.mxu0 0.0
    %132 = vmatprep.mubr.f32.mxu0 0.0
    %133 = vmatmul.mubr.f32.gmra.mxu0 %v63
    %v134 = vpop.f32.mrf.mxu0
    %v135 = vadd.f32 %v60, %v134
    %v136 = vpop.f32.mrf.mxu0
    %137 = vdwg.mxu0
    %vm138 = vcmask 15360
    %139 = vst.msk [vmem:[%s3] sm:$0xff] %vm138, %v135
    // Predicated region
    $region26: #{tpu_custom_call.1} parent=1 // pred_check
      _
    $region27: #{tpu_custom_call.1} parent=1 // pred_check_branch
      %141 = sbr.rel (0) target = $region29
    $region28: #{tpu_custom_call.1} parent=1 // pred_region
      _
    $region29: #{tpu_custom_call.1} parent=1 // pred_fallthru
      _
    // Predicated region
    $region30: #{tpu_custom_call.1} parent=1 // pred_check
      _
    $region31: #{tpu_custom_call.1} parent=1 // pred_check_branch
      %143 = sbr.rel (0) target = $region33
    $region32: #{tpu_custom_call.1} parent=1 // pred_region
      _
    $region33: #{tpu_custom_call.1} parent=1 // pred_fallthru
      _
    %144 = vsyncpa [#allocation3], 1
    %145 = vsyncpa [#allocation6], 1
    %146 = vsyncpa [#allocation4], 1

</llo_original>
